<compile_context>
chip_gen: v6e
topology: v6e:2x2x1
jax: 0.10.0
libtpu: 0.0.40
codegen_flags: <defaults>
</compile_context>

<pallas_src>
import jax
import jax.numpy as jnp
from jax.experimental import pallas as pl
from jax.experimental.pallas import tpu as pltpu


def _binarize_kernel(x_ref, o_ref):
    # vcmp + convert only: matches torch.where(x > 0, 1, 0).float(),
    # including x == 0 -> 0, -0.0 -> 0, and NaN -> (NaN > 0) == False -> 0.
    o_ref[...] = (x_ref[...] > 0).astype(o_ref.dtype)


_LANE_CANDIDATES = (4096, 2048, 1024, 512, 256, 128)


def _choose_layout(total):
    """Return (padded_total, lane_width), lane_width a multiple of 128.

    Prefers the largest multiple-of-128 divisor of `total` (no padding).  If
    none exists, pad the flat array up to the next multiple of 1024 so every
    output store is a full-width vst (padding with 0 is semantically safe:
    (0 > 0) -> 0, and the pad region is sliced off afterwards).
    """
    for cand in _LANE_CANDIDATES:
        if total % cand == 0:
            return total, cand
    padded = ((total + 1023) // 1024) * 1024
    return padded, 1024


def binarize(x):
    """Pallas TPU implementation of torch.where(x > 0, 1, 0).float().

    Accepts any-shaped input; returns float32 of the same shape.
    """
    orig_shape = x.shape
    total = x.size
    if total == 0:
        return jnp.zeros(orig_shape, jnp.float32)

    padded_total, lane_width = _choose_layout(total)

    x_flat = x.reshape(-1)
    if padded_total != total:
        x_flat = jnp.pad(x_flat, (0, padded_total - total))
    x2d = x_flat.reshape(-1, lane_width)
    rows = x2d.shape[0]

    # Dtype-aware tile sizing against the true double-buffered VMEM footprint:
    #   footprint = 2 buffers x (input tile + f32 output tile)
    # Budget 32 MiB total footprint -> ~8 MiB f32 tiles; fits v7x's 32 MiB
    # scoped default (64 MiB physical) and leaves ample headroom on v5e/v6e.
    in_bytes = max(1, jnp.dtype(x.dtype).itemsize)
    sublane = max(8, 32 // min(in_bytes, 4))  # 8 for f32, 16 for bf16, 32 for int8/fp8
    vmem_budget = 32 * 1024 * 1024
    per_elem_vmem = 2 * (in_bytes + 4)
    tile_elems = vmem_budget // per_elem_vmem

    tile_rows = (tile_elems // lane_width) // sublane * sublane
    tile_rows = max(sublane, tile_rows)
    # Don't allocate a block wildly larger than the array itself.
    tile_rows = min(tile_rows, ((rows + sublane - 1) // sublane) * sublane)

    grid = (pl.cdiv(rows, tile_rows),)

    out = pl.pallas_call(
        _binarize_kernel,
        out_shape=jax.ShapeDtypeStruct(x2d.shape, jnp.float32),
        grid=grid,
        in_specs=[pl.BlockSpec((tile_rows, lane_width), lambda i: (i, 0))],
        out_specs=pl.BlockSpec((tile_rows, lane_width), lambda i: (i, 0)),
        compiler_params=pltpu.CompilerParams(
            dimension_semantics=("parallel",),
            # Raise v5e's 16 MiB scoped-VMEM default; comfortably below the
            # physical limit on every generation (64 MiB v7x, 128 MiB v5e/v6e).
            vmem_limit_bytes=48 * 1024 * 1024,
        ),
    )(x2d)

    out_flat = out.reshape(-1)
    if padded_total != total:
        out_flat = out_flat[:total]
    return out_flat.reshape(orig_shape)


if __name__ == "__main__":
    key = jax.random.PRNGKey(0)
    x = jax.random.normal(key, (2, 4, 16, 16), dtype=jnp.float32)

    y = binarize(x)
    jax.block_until_ready(y)

    # Reference check (plain JAX mirror of the torch semantics).
    y_ref = jnp.where(x > 0, 1, 0).astype(jnp.float32)
    assert y.shape == x.shape
    assert y.dtype == jnp.float32
    assert bool(jnp.all(y == y_ref))

    # Zero / negative / NaN mix with a size that has no multiple-of-128 divisor
    # (exercises the pad-and-slice lane-dense fallback path).
    x2 = jnp.array([[-1.0, 0.0, 2.5], [jnp.nan, 1e-9, -0.0]], dtype=jnp.float32)
    y2 = binarize(x2)
    jax.block_until_ready(y2)
    y2_ref = jnp.where(x2 > 0, 1, 0).astype(jnp.float32)
    assert bool(jnp.all(y2 == y2_ref))

    # Narrow-dtype input (exercises dtype-aware sublane/tile sizing).
    x3 = jax.random.normal(key, (8, 3, 16, 16), dtype=jnp.bfloat16)
    y3 = binarize(x3)
    jax.block_until_ready(y3)
    y3_ref = jnp.where(x3 > 0, 1, 0).astype(jnp.float32)
    assert y3.dtype == jnp.float32
    assert bool(jnp.all(y3 == y3_ref))

    print("KERNEL_OK")
</pallas_src>

<mosaic_0001>
module attributes {stable_mosaic.version = 11 : i64} {
  func.func @_binarize_kernel(%arg0: i32, %arg1: memref<8x2048xf32, #tpu.memory_space<vmem>>, %arg2: memref<8x2048xf32, #tpu.memory_space<vmem>>) attributes {dimension_semantics = [#tpu.dimension_semantics<parallel>], iteration_bounds = array<i64: 1>, scalar_prefetch = 0 : i64, scratch_operands = 0 : i64, tpu.core_type = #tpu.core_type<tc>, window_params = [{transform_indices = @transform_0, window_bounds = array<i64: 8, 2048>}, {transform_indices = @transform_1, window_bounds = array<i64: 8, 2048>}]} {
    %c0 = arith.constant 0 : index
    %c0_0 = arith.constant 0 : index
    %0 = vector.load %arg1[%c0, %c0_0] : memref<8x2048xf32, #tpu.memory_space<vmem>>, vector<8x2048xf32>
    %cst = arith.constant 0.000000e+00 : f32
    %1 = vector.broadcast %cst : f32 to vector<8x2048xf32>
    %2 = arith.cmpf ogt, %0, %1 : vector<8x2048xf32>
    %3 = arith.extui %2 : vector<8x2048xi1> to vector<8x2048xi32>
    %4 = arith.sitofp %3 : vector<8x2048xi32> to vector<8x2048xf32>
    %c0_1 = arith.constant 0 : index
    %c0_2 = arith.constant 0 : index
    %5 = vector.load %arg2[%c0_1, %c0_2] : memref<8x2048xf32, #tpu.memory_space<vmem>>, vector<8x2048xf32>
    tpu.vector_store %arg2[%c0_1, %c0_2], %4 {strides = array<i32>} : memref<8x2048xf32, #tpu.memory_space<vmem>>, vector<8x2048xf32>,
    return
  }
  func.func @transform_0(%arg0: i32) -> (i32, i32) {
    %c0_i32 = arith.constant 0 : i32
    %c0_i32_0 = arith.constant 0 : i32
    return %arg0, %c0_i32 : i32, i32
  }
  func.func @transform_1(%arg0: i32) -> (i32, i32) {
    %c0_i32 = arith.constant 0 : i32
    %c0_i32_0 = arith.constant 0 : i32
    return %arg0, %c0_i32 : i32, i32
  }
}

</mosaic_0001>

<llo_original>
// kernel: tpu_custom_call.1
$region0: #{tpu_custom_call.1}
  #allocation0 [shape = 'u32[]', space=smem, size = 0x4, offset = 0x4, fixed_abs, tag = 'smem constant byte address 0x4 - core index']
  #allocation1 [shape = 'u32[144,128]{1,0:T(1,128)}', space=vmem, size = 0x12000, scoped, tag = 'internal scratch']
  %s0 = inlined_call_operand.hbm [shape: f32[1,2048], index: 0, kind: input, shape index: {}]
  %s1 = inlined_call_operand.hbm [shape: f32[1,2048], index: 1, kind: output, shape index: {}]
  %s2 = sld [smem:[#allocation0]]
  $region18: #{tpu_custom_call.1} parent=0
    _
  %s4 = ssub.s32 1, %s2
  %s5 = scalar_select 0, %s4, %s2
  $region1: #{tpu_custom_call.1} parent=0
    #allocation2 [shape = 'u8[65536]{0}', space=vmem, size = 0x10000, scoped, tag = 'input window, operand 0, single buffered']
    #allocation3 [shape = 's32[1]{0}', space=sflag, size = 0x4, scoped, tag = 'scoped memory for tpu_custom_call.1']
    #allocation4 [shape = 's32[1]{0}', space=sflag, size = 0x4, scoped, tag = 'scoped memory for tpu_custom_call.1']
    #allocation5 [shape = 'u8[65536]{0}', space=vmem, size = 0x10000, scoped, tag = 'output window, operand 0, single buffered']
    %6 = vsyncpa [#allocation3], 0
    %7 = vsyncpa [#allocation4], 0
    // Predicated region
    $region2: #{tpu_custom_call.1} parent=1 // pred_check
      _
    $region3: #{tpu_custom_call.1} parent=1 // pred_check_branch
      %9 = sbr.rel (0) target = $region5
    $region4: #{tpu_custom_call.1} parent=1 // pred_region
      %s11 = ssub.s32 2048, 256
      %12 = vsyncadd [#allocation3], %s11
      %s13 = sshll.u32 [#allocation2], 4
      %s14 = int_to_ptr.vmem [resolvable:$true] %s13
      %19 = dma.hbm_to_vmem [thread:$0]  %s0, 256, %s14, [#allocation3], 256, 256, 16
    $region5: #{tpu_custom_call.1} parent=1 // pred_fallthru
      _
    // Predicated region
    $region6: #{tpu_custom_call.1} parent=1 // pred_check
      _
    $region7: #{tpu_custom_call.1} parent=1 // pred_check_branch
      %21 = sbr.rel (0) target = $region9
    $region8: #{tpu_custom_call.1} parent=1 // pred_region
      %22 = dma.done [#allocation3], 2048
    $region9: #{tpu_custom_call.1} parent=1 // pred_fallthru
      _
    %v23 = vld [vmem:[#allocation2] sm:$0xff]
    %v24 = vld [vmem:[#allocation2 + $0x8] sm:$0xff]
    %v25 = vld [vmem:[#allocation2 + $0x10] sm:$0xff]
    %v26 = vld [vmem:[#allocation2 + $0x18] sm:$0xff]
    %v27 = vld [vmem:[#allocation2 + $0x20] sm:$0xff]
    %v28 = vld [vmem:[#allocation2 + $0x28] sm:$0xff]
    %v29 = vld [vmem:[#allocation2 + $0x30] sm:$0xff]
    %v30 = vld [vmem:[#allocation2 + $0x38] sm:$0xff]
    %v31 = vld [vmem:[#allocation2 + $0x40] sm:$0xff]
    %v32 = vld [vmem:[#allocation2 + $0x48] sm:$0xff]
    %v33 = vld [vmem:[#allocation2 + $0x50] sm:$0xff]
    %v34 = vld [vmem:[#allocation2 + $0x58] sm:$0xff]
    %v35 = vld [vmem:[#allocation2 + $0x60] sm:$0xff]
    %v36 = vld [vmem:[#allocation2 + $0x68] sm:$0xff]
    %v37 = vld [vmem:[#allocation2 + $0x70] sm:$0xff]
    %v38 = vld [vmem:[#allocation2 + $0x78] sm:$0xff]
    %vm39 = vcmp.gt.f32.partialorder %v23, 0.0
    %vm40 = vcmp.gt.f32.partialorder %v24, 0.0
    %vm41 = vcmp.gt.f32.partialorder %v25, 0.0
    %vm42 = vcmp.gt.f32.partialorder %v26, 0.0
    %vm43 = vcmp.gt.f32.partialorder %v27, 0.0
    %vm44 = vcmp.gt.f32.partialorder %v28, 0.0
    %vm45 = vcmp.gt.f32.partialorder %v29, 0.0
    %vm46 = vcmp.gt.f32.partialorder %v30, 0.0
    %vm47 = vcmp.gt.f32.partialorder %v31, 0.0
    %vm48 = vcmp.gt.f32.partialorder %v32, 0.0
    %vm49 = vcmp.gt.f32.partialorder %v33, 0.0
    %vm50 = vcmp.gt.f32.partialorder %v34, 0.0
    %vm51 = vcmp.gt.f32.partialorder %v35, 0.0
    %vm52 = vcmp.gt.f32.partialorder %v36, 0.0
    %vm53 = vcmp.gt.f32.partialorder %v37, 0.0
    %vm54 = vcmp.gt.f32.partialorder %v38, 0.0
    %v55 = vsel %vm39, 1, 0
    %v56 = vsel %vm40, 1, 0
    %v57 = vsel %vm41, 1, 0
    %v58 = vsel %vm42, 1, 0
    %v59 = vsel %vm43, 1, 0
    %v60 = vsel %vm44, 1, 0
    %v61 = vsel %vm45, 1, 0
    %v62 = vsel %vm46, 1, 0
    %v63 = vsel %vm47, 1, 0
    %v64 = vsel %vm48, 1, 0
    %v65 = vsel %vm49, 1, 0
    %v66 = vsel %vm50, 1, 0
    %v67 = vsel %vm51, 1, 0
    %v68 = vsel %vm52, 1, 0
    %v69 = vsel %vm53, 1, 0
    %v70 = vsel %vm54, 1, 0
    %v71 = vcvt.s32.f32 %v55
    %v72 = vcvt.s32.f32 %v56
    %v73 = vcvt.s32.f32 %v57
    %v74 = vcvt.s32.f32 %v58
    %v75 = vcvt.s32.f32 %v59
    %v76 = vcvt.s32.f32 %v60
    %v77 = vcvt.s32.f32 %v61
    %v78 = vcvt.s32.f32 %v62
    %v79 = vcvt.s32.f32 %v63
    %v80 = vcvt.s32.f32 %v64
    %v81 = vcvt.s32.f32 %v65
    %v82 = vcvt.s32.f32 %v66
    %v83 = vcvt.s32.f32 %v67
    %v84 = vcvt.s32.f32 %v68
    %v85 = vcvt.s32.f32 %v69
    %v86 = vcvt.s32.f32 %v70
    %87 = vst [vmem:[#allocation5] sm:$0xff] %v71
    %88 = vst [vmem:[#allocation5 + $0x8] sm:$0xff] %v72
    %89 = vst [vmem:[#allocation5 + $0x10] sm:$0xff] %v73
    %90 = vst [vmem:[#allocation5 + $0x18] sm:$0xff] %v74
    %91 = vst [vmem:[#allocation5 + $0x20] sm:$0xff] %v75
    %92 = vst [vmem:[#allocation5 + $0x28] sm:$0xff] %v76
    %93 = vst [vmem:[#allocation5 + $0x30] sm:$0xff] %v77
    %94 = vst [vmem:[#allocation5 + $0x38] sm:$0xff] %v78
    %95 = vst [vmem:[#allocation5 + $0x40] sm:$0xff] %v79
    %96 = vst [vmem:[#allocation5 + $0x48] sm:$0xff] %v80
    %97 = vst [vmem:[#allocation5 + $0x50] sm:$0xff] %v81
    %98 = vst [vmem:[#allocation5 + $0x58] sm:$0xff] %v82
    %99 = vst [vmem:[#allocation5 + $0x60] sm:$0xff] %v83
    %100 = vst [vmem:[#allocation5 + $0x68] sm:$0xff] %v84
    %101 = vst [vmem:[#allocation5 + $0x70] sm:$0xff] %v85
    %102 = vst [vmem:[#allocation5 + $0x78] sm:$0xff] %v86
    // Predicated region
    $region10: #{tpu_custom_call.1} parent=1 // pred_check
      _
    $region11: #{tpu_custom_call.1} parent=1 // pred_check_branch
      %104 = sbr.rel (0) target = $region13
    $region12: #{tpu_custom_call.1} parent=1 // pred_region
      %s106 = ssub.s32 2048, 256
      %107 = vsyncadd [#allocation4], %s106
      %s108 = sshll.u32 [#allocation5], 4
      %s109 = int_to_ptr.vmem [resolvable:$true] %s108
      %114 = dma.vmem_to_hbm [thread:$0]  %s109, 256, %s1, [#allocation4], 256, 256, 16
    $region13: #{tpu_custom_call.1} parent=1 // pred_fallthru
      _
    // Predicated region
    $region14: #{tpu_custom_call.1} parent=1 // pred_check
      _
    $region15: #{tpu_custom_call.1} parent=1 // pred_check_branch
      %116 = sbr.rel (0) target = $region17
    $region16: #{tpu_custom_call.1} parent=1 // pred_region
      %117 = dma.done [#allocation4], 2048
    $region17: #{tpu_custom_call.1} parent=1 // pred_fallthru
      _
    %118 = vsyncpa [#allocation3], 1
    %119 = vsyncpa [#allocation4], 1

</llo_original>
